<compile_context>
chip_gen: v7x
topology: tpu7x:2x2x1
jax: 0.10.0
libtpu: 0.0.40
codegen_flags: <defaults>
</compile_context>

<pallas_src>
import math
import jax
import jax.numpy as jnp
from jax.experimental import pallas as pl
from jax.experimental.pallas import tpu as pltpu


def _round_up(x, m):
    return (x + m - 1) // m * m


# ----------------------------- Pallas kernel --------------------------------
def _gru_kernel(x_ref, h_ref, wx_ref, wh_ref, b_ref, out_ref):
    """Single-step GRUCell, one batch tile.

    Two MXU dots (bf16 or f32 operands, f32 accumulation):
        gx = x @ Wx + b_x     columns: [ r | z | i_n ]   (b_x r/z = b_ih + b_hh)
        gh = h @ Wh + b_h     columns: [ r | z | h_n ]   (b_h only on h_n)
    f32 epilogue on the VPU/EUP:
        r  = sigmoid(gx_r + gh_r);  z = sigmoid(gx_z + gh_z)
        n  = tanh(gx_n + r * gh_n)
        h' = n + z * (h - n)
    """
    nh = out_ref.shape[-1]

    gx = jnp.dot(x_ref[...], wx_ref[...],
                 preferred_element_type=jnp.float32) + b_ref[0:1, :]
    gh = jnp.dot(h_ref[...], wh_ref[...],
                 preferred_element_type=jnp.float32) + b_ref[1:2, :]

    r = jax.nn.sigmoid(gx[:, 0 * nh:1 * nh] + gh[:, 0 * nh:1 * nh])
    z = jax.nn.sigmoid(gx[:, 1 * nh:2 * nh] + gh[:, 1 * nh:2 * nh])
    n = jnp.tanh(gx[:, 2 * nh:3 * nh] + r * gh[:, 2 * nh:3 * nh])

    h = h_ref[...].astype(jnp.float32)     # reuse matmul operand; free VPU cast
    out_ref[...] = n + z * (h - n)


# --------------------------- one-time parameter prep -------------------------
def prepare_gru_params(w_ih, w_hh, b_ih, b_hh, *, matmul_dtype=jnp.bfloat16):
    """Hoisted out of the per-step call: build packed, transposed gate weights.

    w_ih: (3*nhid, ninp), w_hh: (3*nhid, nhid), biases: (3*nhid,).
    Returns (Wx (ninp, 3*nhid), Wh (nhid, 3*nhid), b (2, 3*nhid) f32).
    PyTorch GRUCell row order is [r | z | n]; transposing keeps the same packed
    column order with zero structural padding.
    """
    nhid = w_hh.shape[-1]
    wx = w_ih.astype(jnp.float32).T.astype(matmul_dtype)   # (ninp, 3*nhid)
    wh = w_hh.astype(jnp.float32).T.astype(matmul_dtype)   # (nhid, 3*nhid)

    bih = b_ih.astype(jnp.float32)
    bhh = b_hh.astype(jnp.float32)
    b = jnp.zeros((2, 3 * nhid), jnp.float32)
    b = b.at[0, 0 * nhid:1 * nhid].set(bih[0 * nhid:1 * nhid] + bhh[0 * nhid:1 * nhid])
    b = b.at[0, 1 * nhid:2 * nhid].set(bih[1 * nhid:2 * nhid] + bhh[1 * nhid:2 * nhid])
    b = b.at[0, 2 * nhid:3 * nhid].set(bih[2 * nhid:3 * nhid])
    b = b.at[1, 2 * nhid:3 * nhid].set(bhh[2 * nhid:3 * nhid])
    return wx, wh, b


# ------------------------------ per-step wrapper ------------------------------
def gru_cell_pallas(x, h, prepared, *, batch_tile=128):
    """x: (B, ninp), h: (B, nhid), prepared = prepare_gru_params(...).
    Returns h_next: (B, nhid) in f32."""
    wx, wh, b = prepared
    B, ninp = x.shape
    nhid = h.shape[-1]
    G = 3 * nhid
    mm_dtype = wx.dtype

    # Batch tiling: sublane-aligned tile, grid marked "parallel" (v7x 2 TCs).
    bm = min(_round_up(B, 8), batch_tile)
    Bp = _round_up(B, bm)

    xm = x.astype(mm_dtype)
    hm = h.astype(mm_dtype)
    if Bp != B:
        pad = ((0, Bp - B), (0, 0))
        xm = jnp.pad(xm, pad)
        hm = jnp.pad(hm, pad)

    itemsize = jnp.dtype(mm_dtype).itemsize
    weight_bytes = (wx.size + wh.size) * itemsize + b.size * 4
    act_bytes = (xm.size + hm.size) * itemsize + Bp * nhid * 4
    cost = pl.CostEstimate(
        flops=2 * Bp * (ninp + nhid) * G,
        transcendentals=3 * Bp * nhid,
        bytes_accessed=weight_bytes + act_bytes,
    )

    # VMEM footprint: resident weights + double-buffered activation/out tiles.
    vmem_need = (weight_bytes
                 + 2 * (bm * ninp + bm * nhid) * itemsize
                 + 2 * bm * nhid * 4)
    vmem_limit = int(min(48 << 20, max(16 << 20, 4 * vmem_need)))

    out = pl.pallas_call(
        _gru_kernel,
        out_shape=jax.ShapeDtypeStruct((Bp, nhid), jnp.float32),
        grid=(Bp // bm,),
        in_specs=[
            pl.BlockSpec((bm, ninp), lambda i: (i, 0)),   # x tile
            pl.BlockSpec((bm, nhid), lambda i: (i, 0)),   # h tile (also blend)
            pl.BlockSpec((ninp, G), lambda i: (0, 0)),    # Wx (grid-invariant)
            pl.BlockSpec((nhid, G), lambda i: (0, 0)),    # Wh (grid-invariant)
            pl.BlockSpec((2, G), lambda i: (0, 0)),       # fused biases (f32)
        ],
        out_specs=pl.BlockSpec((bm, nhid), lambda i: (i, 0)),
        compiler_params=pltpu.CompilerParams(
            dimension_semantics=("parallel",),
            vmem_limit_bytes=vmem_limit),
        cost_estimate=cost,
    )(xm, hm, wx, wh, b)

    return out[:B]


# --------------------------- parameter utilities -----------------------------
def zero_matrix_elements(matrix, k):
    """JAX version of the PyTorch helper: keep only the k block-diagonal blocks."""
    r, c = matrix.shape
    assert r % k == 0 and c % k == 0
    g1, g2 = r // k, c // k
    row_blk = jnp.arange(r) // g1
    col_blk = jnp.arange(c) // g2
    mask = (row_blk[:, None] == col_blk[None, :]).astype(matrix.dtype)
    return matrix * mask


def blockify_params(w_ih, w_hh, b_ih, b_hh, nhid, k):
    """Zero off-block-diagonal entries of each of the 3 gate sub-matrices.
    (The PyTorch loop runs e in range(4); the 4th slice is empty for a
    (3*nhid, .) matrix, so only gates 0..2 are affected — same here.)"""
    def blockify(w):
        parts = [zero_matrix_elements(w[e * nhid:(e + 1) * nhid], k) for e in range(3)]
        return jnp.concatenate(parts, axis=0)
    return blockify(w_ih), blockify(w_hh), b_ih, b_hh


def init_gru_params(key, ninp, nhid):
    """Deterministic init matching torch.nn.GRUCell's U(-1/sqrt(nhid), 1/sqrt(nhid))."""
    std = 1.0 / math.sqrt(nhid)
    k1, k2, k3, k4 = jax.random.split(key, 4)
    w_ih = jax.random.uniform(k1, (3 * nhid, ninp), jnp.float32, -std, std)
    w_hh = jax.random.uniform(k2, (3 * nhid, nhid), jnp.float32, -std, std)
    b_ih = jax.random.uniform(k3, (3 * nhid,), jnp.float32, -std, std)
    b_hh = jax.random.uniform(k4, (3 * nhid,), jnp.float32, -std, std)
    return w_ih, w_hh, b_ih, b_hh


# ------------------------------- reference -----------------------------------
def gru_cell_ref(x, h, w_ih, w_hh, b_ih, b_hh):
    nhid = h.shape[-1]
    gi = x @ w_ih.T + b_ih
    gh = h @ w_hh.T + b_hh
    i_r, i_z, i_n = gi[:, :nhid], gi[:, nhid:2 * nhid], gi[:, 2 * nhid:]
    h_r, h_z, h_n = gh[:, :nhid], gh[:, nhid:2 * nhid], gh[:, 2 * nhid:]
    r = jax.nn.sigmoid(i_r + h_r)
    z = jax.nn.sigmoid(i_z + h_z)
    n = jnp.tanh(i_n + r * h_n)
    return (1.0 - z) * n + z * h


# --------------------------------- main ---------------------------------------
if __name__ == "__main__":
    ninp, nhid, k_blocks = 32, 32, 4
    batch = 8

    key = jax.random.PRNGKey(0)
    kx1, kx2, kh, kp = jax.random.split(key, 4)

    x1 = jax.random.normal(kx1, (batch, ninp), jnp.float32)
    x2 = jax.random.normal(kx2, (batch, ninp), jnp.float32)
    h0 = jax.random.normal(kh, (batch, nhid), jnp.float32)

    w_ih, w_hh, b_ih, b_hh = init_gru_params(kp, ninp, nhid)
    # Apply BlockGRU.blockify_params (block-diagonal structure per gate).
    w_ih, w_hh, b_ih, b_hh = blockify_params(w_ih, w_hh, b_ih, b_hh, nhid, k_blocks)

    # One-time parameter prep (hoisted out of the per-step call).
    prepared = prepare_gru_params(w_ih, w_hh, b_ih, b_hh, matmul_dtype=jnp.bfloat16)

    # Two steps with the same prepared params (demonstrates the hoist/reuse).
    h1 = gru_cell_pallas(x1, h0, prepared)
    h2 = gru_cell_pallas(x2, h1, prepared)
    jax.block_until_ready(h2)

    h1_ref = gru_cell_ref(x1, h0, w_ih, w_hh, b_ih, b_hh)
    h2_ref = gru_cell_ref(x2, h1_ref, w_ih, w_hh, b_ih, b_hh)

    assert h1.shape == (batch, nhid) and h2.shape == (batch, nhid)
    # bf16 MXU operands with f32 accumulation -> loosened tolerance.
    # (Pass matmul_dtype=jnp.float32 to prepare_gru_params for tighter parity.)
    assert jnp.allclose(h1, h1_ref, atol=2e-2, rtol=2e-2), "step 1 mismatch vs reference"
    assert jnp.allclose(h2, h2_ref, atol=2e-2, rtol=2e-2), "step 2 mismatch vs reference"

    print("KERNEL_OK")
</pallas_src>

<mosaic_0001>
module attributes {stable_mosaic.version = 11 : i64} {
  func.func @_gru_kernel(%arg0: i32, %arg1: memref<8x32xbf16, #tpu.memory_space<vmem>>, %arg2: memref<8x32xbf16, #tpu.memory_space<vmem>>, %arg3: memref<32x96xbf16, #tpu.memory_space<vmem>>, %arg4: memref<32x96xbf16, #tpu.memory_space<vmem>>, %arg5: memref<2x96xf32, #tpu.memory_space<vmem>>, %arg6: memref<8x32xf32, #tpu.memory_space<vmem>>) attributes {dimension_semantics = [#tpu.dimension_semantics<parallel>], iteration_bounds = array<i64: 1>, scalar_prefetch = 0 : i64, scratch_operands = 0 : i64, tpu.core_type = #tpu.core_type<tc>, window_params = [{transform_indices = @transform_0, window_bounds = array<i64: 8, 32>}, {transform_indices = @transform_1, window_bounds = array<i64: 8, 32>}, {pipeline_mode = #tpu.pipeline_mode<synchronous>, transform_indices = @transform_2, window_bounds = array<i64: 32, 96>}, {pipeline_mode = #tpu.pipeline_mode<synchronous>, transform_indices = @transform_3, window_bounds = array<i64: 32, 96>}, {pipeline_mode = #tpu.pipeline_mode<synchronous>, transform_indices = @transform_4, window_bounds = array<i64: 2, 96>}, {transform_indices = @transform_5, window_bounds = array<i64: 8, 32>}]} {
    %c0 = arith.constant 0 : index
    %c0_0 = arith.constant 0 : index
    %0 = vector.load %arg1[%c0, %c0_0] : memref<8x32xbf16, #tpu.memory_space<vmem>>, vector<8x32xbf16>
    %c0_1 = arith.constant 0 : index
    %c0_2 = arith.constant 0 : index
    %1 = vector.load %arg3[%c0_1, %c0_2] : memref<32x96xbf16, #tpu.memory_space<vmem>>, vector<32x96xbf16>
    %cst = arith.constant dense<0.000000e+00> : vector<8x96xf32>
    %2 = tpu.matmul %0, %1, %cst {dimension_numbers = #tpu.dot_dimension_numbers<[1], [0], [0], [1], [0, 0, 1, 1], [], []>} : vector<8x32xbf16>, vector<32x96xbf16>, vector<8x96xf32> -> vector<8x96xf32>
    %c0_3 = arith.constant 0 : index
    %c0_4 = arith.constant 0 : index
    %3 = vector.load %arg5[%c0_3, %c0_4] : memref<2x96xf32, #tpu.memory_space<vmem>>, vector<1x96xf32>
    %4 = vector.broadcast %3 : vector<1x96xf32> to vector<8x96xf32>
    %5 = arith.addf %2, %4 : vector<8x96xf32>
    %c0_5 = arith.constant 0 : index
    %c0_6 = arith.constant 0 : index
    %6 = vector.load %arg2[%c0_5, %c0_6] : memref<8x32xbf16, #tpu.memory_space<vmem>>, vector<8x32xbf16>
    %c0_7 = arith.constant 0 : index
    %c0_8 = arith.constant 0 : index
    %7 = vector.load %arg4[%c0_7, %c0_8] : memref<32x96xbf16, #tpu.memory_space<vmem>>, vector<32x96xbf16>
    %cst_9 = arith.constant dense<0.000000e+00> : vector<8x96xf32>
    %8 = tpu.matmul %6, %7, %cst_9 {dimension_numbers = #tpu.dot_dimension_numbers<[1], [0], [0], [1], [0, 0, 1, 1], [], []>} : vector<8x32xbf16>, vector<32x96xbf16>, vector<8x96xf32> -> vector<8x96xf32>
    %c1 = arith.constant 1 : index
    %c0_10 = arith.constant 0 : index
    %9 = vector.load %arg5[%c1, %c0_10] : memref<2x96xf32, #tpu.memory_space<vmem>>, vector<1x96xf32>
    %10 = vector.broadcast %9 : vector<1x96xf32> to vector<8x96xf32>
    %11 = arith.addf %8, %10 : vector<8x96xf32>
    %12 = vector.extract_strided_slice %5 {offsets = [0, 0], sizes = [8, 32], strides = [1, 1]} : vector<8x96xf32> to vector<8x32xf32>
    %13 = vector.extract_strided_slice %11 {offsets = [0, 0], sizes = [8, 32], strides = [1, 1]} : vector<8x96xf32> to vector<8x32xf32>
    %14 = arith.addf %12, %13 : vector<8x32xf32>
    %15 = arith.negf %14 : vector<8x32xf32>
    %16 = math.exp %15 : vector<8x32xf32>
    %cst_11 = arith.constant 1.000000e+00 : f32
    %17 = vector.broadcast %cst_11 : f32 to vector<8x32xf32>
    %18 = arith.addf %17, %16 : vector<8x32xf32>
    %19 = arith.divf %17, %18 : vector<8x32xf32>
    %20 = vector.extract_strided_slice %5 {offsets = [0, 32], sizes = [8, 32], strides = [1, 1]} : vector<8x96xf32> to vector<8x32xf32>
    %21 = vector.extract_strided_slice %11 {offsets = [0, 32], sizes = [8, 32], strides = [1, 1]} : vector<8x96xf32> to vector<8x32xf32>
    %22 = arith.addf %20, %21 : vector<8x32xf32>
    %23 = arith.negf %22 : vector<8x32xf32>
    %24 = math.exp %23 : vector<8x32xf32>
    %cst_12 = arith.constant 1.000000e+00 : f32
    %25 = vector.broadcast %cst_12 : f32 to vector<8x32xf32>
    %26 = arith.addf %25, %24 : vector<8x32xf32>
    %27 = arith.divf %25, %26 : vector<8x32xf32>
    %28 = vector.extract_strided_slice %5 {offsets = [0, 64], sizes = [8, 32], strides = [1, 1]} : vector<8x96xf32> to vector<8x32xf32>
    %29 = vector.extract_strided_slice %11 {offsets = [0, 64], sizes = [8, 32], strides = [1, 1]} : vector<8x96xf32> to vector<8x32xf32>
    %30 = arith.mulf %19, %29 : vector<8x32xf32>
    %31 = arith.addf %28, %30 : vector<8x32xf32>
    %32 = math.tanh %31 : vector<8x32xf32>
    %c0_13 = arith.constant 0 : index
    %c0_14 = arith.constant 0 : index
    %33 = vector.load %arg2[%c0_13, %c0_14] : memref<8x32xbf16, #tpu.memory_space<vmem>>, vector<8x32xbf16>
    %34 = arith.extf %33 : vector<8x32xbf16> to vector<8x32xf32>
    %35 = arith.subf %34, %32 : vector<8x32xf32>
    %36 = arith.mulf %27, %35 : vector<8x32xf32>
    %37 = arith.addf %32, %36 : vector<8x32xf32>
    %c0_15 = arith.constant 0 : index
    %c0_16 = arith.constant 0 : index
    %38 = vector.load %arg6[%c0_15, %c0_16] : memref<8x32xf32, #tpu.memory_space<vmem>>, vector<8x32xf32>
    tpu.vector_store %arg6[%c0_15, %c0_16], %37 {strides = array<i32>} : memref<8x32xf32, #tpu.memory_space<vmem>>, vector<8x32xf32>,
    return
  }
  func.func @transform_0(%arg0: i32) -> (i32, i32) {
    %c0_i32 = arith.constant 0 : i32
    %c0_i32_0 = arith.constant 0 : i32
    return %arg0, %c0_i32 : i32, i32
  }
  func.func @transform_1(%arg0: i32) -> (i32, i32) {
    %c0_i32 = arith.constant 0 : i32
    %c0_i32_0 = arith.constant 0 : i32
    return %arg0, %c0_i32 : i32, i32
  }
  func.func @transform_2(%arg0: i32) -> (i32, i32) {
    %c0_i32 = arith.constant 0 : i32
    %c0_i32_0 = arith.constant 0 : i32
    %c0_i32_1 = arith.constant 0 : i32
    return %c0_i32, %c0_i32_0 : i32, i32
  }
  func.func @transform_3(%arg0: i32) -> (i32, i32) {
    %c0_i32 = arith.constant 0 : i32
    %c0_i32_0 = arith.constant 0 : i32
    %c0_i32_1 = arith.constant 0 : i32
    return %c0_i32, %c0_i32_0 : i32, i32
  }
  func.func @transform_4(%arg0: i32) -> (i32, i32) {
    %c0_i32 = arith.constant 0 : i32
    %c0_i32_0 = arith.constant 0 : i32
    %c0_i32_1 = arith.constant 0 : i32
    return %c0_i32, %c0_i32_0 : i32, i32
  }
  func.func @transform_5(%arg0: i32) -> (i32, i32) {
    %c0_i32 = arith.constant 0 : i32
    %c0_i32_0 = arith.constant 0 : i32
    return %arg0, %c0_i32 : i32, i32
  }
}

</mosaic_0001>

<llo_original>
// kernel: tpu_custom_call.1
$region0: #{tpu_custom_call.1}
  #allocation0 [shape = 'u32[]', space=smem, size = 0x4, offset = 0x4, fixed_abs, tag = 'smem constant byte address 0x4 - core index']
  #allocation1 [shape = 'u32[144,128]{1,0:T(1,128)}', space=vmem, size = 0x12000, scoped, tag = 'internal scratch']
  %s0 = inlined_call_operand.hbm [shape: bf16[8,32], index: 0, kind: input, shape index: {}]
  %s1 = inlined_call_operand.hbm [shape: bf16[8,32], index: 1, kind: input, shape index: {}]
  %s2 = inlined_call_operand.hbm [shape: bf16[32,96], index: 2, kind: input, shape index: {}]
  %s3 = inlined_call_operand.hbm [shape: bf16[32,96], index: 3, kind: input, shape index: {}]
  %s4 = inlined_call_operand.vmem [shape: f32[2,96], index: 4, kind: input, shape index: {}]
  %s5 = inlined_call_operand.hbm [shape: f32[8,32], index: 5, kind: output, shape index: {}]
  %s6 = sld [smem:[#allocation0]]
  $region46: #{tpu_custom_call.1} parent=0
    _
  %s8 = ssub.s32 1, %s6
  %s9 = scalar_select 0, %s8, %s6
  $region1: #{tpu_custom_call.1} parent=0
    #allocation2 [shape = 'u8[2048]{0}', space=vmem, size = 0x800, scoped, tag = 'input window, operand 0, single buffered']
    #allocation3 [shape = 's32[1]{0}', space=sflag, size = 0x4, scoped, tag = 'scoped memory for tpu_custom_call.1']
    #allocation4 [shape = 's32[1]{0}', space=sflag, size = 0x4, scoped, tag = 'scoped memory for tpu_custom_call.1']
    #allocation5 [shape = 'u8[2048]{0}', space=vmem, size = 0x800, scoped, tag = 'input window, operand 1, single buffered']
    #allocation6 [shape = 's32[1]{0}', space=sflag, size = 0x4, scoped, tag = 'scoped memory for tpu_custom_call.1']
    #allocation7 [shape = 'u8[8192]{0}', space=vmem, size = 0x2000, scoped, tag = 'input window, operand 2, single buffered']
    #allocation8 [shape = 'u8[8192]{0}', space=vmem, size = 0x2000, scoped, tag = 'input window, operand 3, single buffered']
    #allocation9 [shape = 's32[1]{0}', space=sflag, size = 0x4, scoped, tag = 'scoped memory for tpu_custom_call.1']
    #allocation10 [shape = 'u8[4096]{0}', space=vmem, size = 0x1000, scoped, tag = 'output window, operand 0, single buffered']
    %10 = vsyncpa [#allocation3], 0
    %11 = vsyncpa [#allocation6], 0
    %12 = vsyncpa [#allocation9], 0
    %13 = vsyncpa [#allocation4], 0
    // Predicated region
    $region2: #{tpu_custom_call.1} parent=1 // pred_check
      _
    $region3: #{tpu_custom_call.1} parent=1 // pred_check_branch
      %15 = sbr.rel (0) target = $region5
    $region4: #{tpu_custom_call.1} parent=1 // pred_region
      %s17 = ssub.s32 64, 64
      %18 = vsyncadd [#allocation3], %s17
      %s20 = sshll.u32 [#allocation2], 4
      %s21 = int_to_ptr.vmem [resolvable:$true] %s20
      %23 = dma.hbm_to_vmem [thread:$0]  %s0, 64, %s21, [#allocation3]
    $region5: #{tpu_custom_call.1} parent=1 // pred_fallthru
      _
    // Predicated region
    $region6: #{tpu_custom_call.1} parent=1 // pred_check
      _
    $region7: #{tpu_custom_call.1} parent=1 // pred_check_branch
      %25 = sbr.rel (0) target = $region9
    $region8: #{tpu_custom_call.1} parent=1 // pred_region
      %s27 = ssub.s32 64, 64
      %28 = vsyncadd [#allocation6], %s27
      %s30 = sshll.u32 [#allocation5], 4
      %s31 = int_to_ptr.vmem [resolvable:$true] %s30
      %33 = dma.hbm_to_vmem [thread:$0]  %s1, 64, %s31, [#allocation6]
    $region9: #{tpu_custom_call.1} parent=1 // pred_fallthru
      _
    // Predicated region
    $region10: #{tpu_custom_call.1} parent=1 // pred_check
      _
    $region11: #{tpu_custom_call.1} parent=1 // pred_check_branch
      %35 = sbr.rel (0) target = $region13
    $region12: #{tpu_custom_call.1} parent=1 // pred_region
      %s37 = ssub.s32 256, 256
      %38 = vsyncadd [#allocation6], %s37
      %s39 = sshll.u32 [#allocation7], 4
      %s40 = int_to_ptr.vmem [resolvable:$true] %s39
      %45 = dma.hbm_to_vmem [thread:$0]  %s2, 256, %s40, [#allocation6], 64, 64, 4
    $region13: #{tpu_custom_call.1} parent=1 // pred_fallthru
      _
    // Predicated region
    $region14: #{tpu_custom_call.1} parent=1 // pred_check
      _
    $region15: #{tpu_custom_call.1} parent=1 // pred_check_branch
      %47 = sbr.rel (0) target = $region17
    $region16: #{tpu_custom_call.1} parent=1 // pred_region
      %s49 = ssub.s32 256, 256
      %50 = vsyncadd [#allocation9], %s49
      %s51 = sshll.u32 [#allocation8], 4
      %s52 = int_to_ptr.vmem [resolvable:$true] %s51
      %57 = dma.hbm_to_vmem [thread:$0]  %s3, 256, %s52, [#allocation9], 64, 64, 4
    $region17: #{tpu_custom_call.1} parent=1 // pred_fallthru
      _
    // Predicated region
    $region18: #{tpu_custom_call.1} parent=1 // pred_check
      _
    $region19: #{tpu_custom_call.1} parent=1 // pred_check_branch
      %59 = sbr.rel (0) target = $region21
    $region20: #{tpu_custom_call.1} parent=1 // pred_region
      _
    $region21: #{tpu_custom_call.1} parent=1 // pred_fallthru
      _
    // Predicated region
    $region22: #{tpu_custom_call.1} parent=1 // pred_check
      _
    $region23: #{tpu_custom_call.1} parent=1 // pred_check_branch
      %61 = sbr.rel (0) target = $region25
    $region24: #{tpu_custom_call.1} parent=1 // pred_region
      %62 = dma.done [#allocation3], 64
    $region25: #{tpu_custom_call.1} parent=1 // pred_fallthru
      _
    // Predicated region
    $region26: #{tpu_custom_call.1} parent=1 // pred_check
      _
    $region27: #{tpu_custom_call.1} parent=1 // pred_check_branch
      %64 = sbr.rel (0) target = $region29
    $region28: #{tpu_custom_call.1} parent=1 // pred_region
      %65 = dma.done [#allocation6], 64
    $region29: #{tpu_custom_call.1} parent=1 // pred_fallthru
      _
    // Predicated region
    $region30: #{tpu_custom_call.1} parent=1 // pred_check
      _
    $region31: #{tpu_custom_call.1} parent=1 // pred_check_branch
      %67 = sbr.rel (0) target = $region33
    $region32: #{tpu_custom_call.1} parent=1 // pred_region
      %68 = dma.done [#allocation6], 256
    $region33: #{tpu_custom_call.1} parent=1 // pred_fallthru
      _
    // Predicated region
    $region34: #{tpu_custom_call.1} parent=1 // pred_check
      _
    $region35: #{tpu_custom_call.1} parent=1 // pred_check_branch
      %70 = sbr.rel (0) target = $region37
    $region36: #{tpu_custom_call.1} parent=1 // pred_region
      %71 = dma.done [#allocation9], 256
    $region37: #{tpu_custom_call.1} parent=1 // pred_fallthru
      _
    %v73 = vld [vmem:[#allocation2] sm:$0xf]
    %v74 = vld [vmem:[#allocation7] sm:$0xf]
    %v75 = vld [vmem:[#allocation7 + $0x4] sm:$0xf]
    %v76 = vld [vmem:[#allocation7 + $0x8] sm:$0xf]
    %v77 = vld [vmem:[#allocation7 + $0xc] sm:$0xf]
    %v78 = vld [vmem:[%s4] sm:$0x1]
    %v79 = vlaneseq
    %v80 = vshrl.u32 %v79, 7
    %v81 = vsub.s32 0, %v80
    %v82 = vrot.slane %v78, %v81
    %v87 = vunpack.c.l.b16 %v74
    %v88 = vunpack.c.l.b16 %v75
    %v89 = vunpack.c.l.b16 %v76
    %v90 = vunpack.c.l.b16 %v77
    %v91 = vpack.c.b16 %v88, %v87
    %v92 = vpack.c.b16 %v90, %v89
    %vm95 = vcmask 261120
    %v97 = vsel %vm95, %v73, 0
    %99 = vmatprep.subr.bf16.mxu0 0
    %100 = vmatpush1.bf16.msra.mxu0 %v91
    %101 = vmatprep.subr.bf16.mxu0 0
    %102 = vmatpush1.bf16.msra.mxu0 %v92
    %103 = vmatprep.subr.bf16.mxu0 0
    %104 = vmatpush1.bf16.msra.mxu0 0
    %105 = vmatprep.subr.bf16.mxu0 0
    %106 = vmatpush1.bf16.msra.mxu0 0
    %107 = vmatprep.subr.bf16.mxu0 0
    %108 = vmatpush1.bf16.msra.mxu0 0
    %109 = vmatprep.subr.bf16.mxu0 0
    %110 = vmatpush1.bf16.msra.mxu0 0
    %111 = vmatprep.subr.bf16.mxu0 0
    %112 = vmatpush1.bf16.msra.mxu0 0
    %113 = vmatprep.subr.bf16.mxu0 0
    %114 = vmatpush1.bf16.msra.mxu0 0
    %115 = vmatprep.subr.bf16.mxu0 0
    %116 = vmatpush1.bf16.msra.mxu0 0
    %117 = vmatprep.subr.bf16.mxu0 0
    %118 = vmatpush1.bf16.msra.mxu0 0
    %119 = vmatprep.subr.bf16.mxu0 0
    %120 = vmatpush1.bf16.msra.mxu0 0
    %121 = vmatprep.subr.bf16.mxu0 0
    %122 = vmatpush1.bf16.msra.mxu0 0
    %123 = vmatprep.subr.bf16.mxu0 0
    %124 = vmatpush1.bf16.msra.mxu0 0
    %125 = vmatprep.subr.bf16.mxu0 0
    %126 = vmatpush1.bf16.msra.mxu0 0
    %127 = vmatprep.subr.bf16.mxu0 0
    %128 = vmatpush1.bf16.msra.mxu0 0
    %129 = vmatprep.subr.bf16.mxu0 0
    %130 = vmatpush1.bf16.msra.mxu0 0
    %131 = vmatprep.mubr.bf16.mxu0 0
    %132 = vmatmul.mubr.bf16.gmra.mrb[0].mxu0 %v97
    %v133 = vpop.f32.mrb[0].mxu0
    %v134 = vadd.f32 %v82, %v133
    %v135 = vpop.f32.mrb[0].mxu0
    %v136 = vpop.f32.mrb[0].mxu0
    %v137 = vpop.f32.mrb[0].mxu0
    %138 = vdwg.mxu0
    %v139 = vld [vmem:[#allocation5] sm:$0xf]
    %v140 = vld [vmem:[#allocation8] sm:$0xf]
    %v141 = vld [vmem:[#allocation8 + $0x4] sm:$0xf]
    %v142 = vld [vmem:[#allocation8 + $0x8] sm:$0xf]
    %v143 = vld [vmem:[#allocation8 + $0xc] sm:$0xf]
    %v144 = vld [vmem:[%s4 + $0x1] sm:$0x1]
    %v145 = vlaneseq
    %v146 = vshrl.u32 %v145, 7
    %v147 = vsub.s32 0, %v146
    %v148 = vrot.slane %v144, %v147
    %v153 = vunpack.c.l.b16 %v140
    %v154 = vunpack.c.l.b16 %v141
    %v155 = vunpack.c.l.b16 %v142
    %v156 = vunpack.c.l.b16 %v143
    %v157 = vpack.c.b16 %v154, %v153
    %v158 = vpack.c.b16 %v156, %v155
    %v162 = vsel %vm95, %v139, 0
    %164 = vmatprep.subr.bf16.mxu0 0
    %165 = vmatpush1.bf16.msra.mxu0 %v157
    %166 = vmatprep.subr.bf16.mxu0 0
    %167 = vmatpush1.bf16.msra.mxu0 %v158
    %168 = vmatprep.subr.bf16.mxu0 0
    %169 = vmatpush1.bf16.msra.mxu0 0
    %170 = vmatprep.subr.bf16.mxu0 0
    %171 = vmatpush1.bf16.msra.mxu0 0
    %172 = vmatprep.subr.bf16.mxu0 0
    %173 = vmatpush1.bf16.msra.mxu0 0
    %174 = vmatprep.subr.bf16.mxu0 0
    %175 = vmatpush1.bf16.msra.mxu0 0
    %176 = vmatprep.subr.bf16.mxu0 0
    %177 = vmatpush1.bf16.msra.mxu0 0
    %178 = vmatprep.subr.bf16.mxu0 0
    %179 = vmatpush1.bf16.msra.mxu0 0
    %180 = vmatprep.subr.bf16.mxu0 0
    %181 = vmatpush1.bf16.msra.mxu0 0
    %182 = vmatprep.subr.bf16.mxu0 0
    %183 = vmatpush1.bf16.msra.mxu0 0
    %184 = vmatprep.subr.bf16.mxu0 0
    %185 = vmatpush1.bf16.msra.mxu0 0
    %186 = vmatprep.subr.bf16.mxu0 0
    %187 = vmatpush1.bf16.msra.mxu0 0
    %188 = vmatprep.subr.bf16.mxu0 0
    %189 = vmatpush1.bf16.msra.mxu0 0
    %190 = vmatprep.subr.bf16.mxu0 0
    %191 = vmatpush1.bf16.msra.mxu0 0
    %192 = vmatprep.subr.bf16.mxu0 0
    %193 = vmatpush1.bf16.msra.mxu0 0
    %194 = vmatprep.subr.bf16.mxu0 0
    %195 = vmatpush1.bf16.msra.mxu0 0
    %196 = vmatprep.mubr.bf16.mxu0 0
    %197 = vmatmul.mubr.bf16.gmra.mrb[0].mxu0 %v162
    %v198 = vpop.f32.mrb[0].mxu0
    %v199 = vadd.f32 %v148, %v198
    %v200 = vpop.f32.mrb[0].mxu0
    %v201 = vpop.f32.mrb[0].mxu0
    %v202 = vpop.f32.mrb[0].mxu0
    %203 = vdwg.mxu0
    %v204 = vadd.f32 %v134, %v199
    %v205 = vxor.u32 %v204, 2147483648
    %v206 = vmul.f32 %v205, 1.442695
    %v207 = vpow.pop %v206
    %v208 = vadd.f32 %v207, 1.0
    %v209 = vrcp.pop %v208
    %v210 = vmul.f32 1.0, %v209
    %212 = vrot.lane.b32.xlu0 %v199, 64
    %v213 = vpop.permute.xlu0 %212
    %v215 = vmul.f32 %v210, %v213
    %217 = vrot.lane.b32.xlu0 %v215, 64
    %v218 = vpop.permute.xlu0 %217
    %v220 = vadd.f32 %v134, %v218
    %v221 = vtanh.pop %v220
    %v222 = vunpack.c.l.bf16 %v139
    %224 = vrot.lane.b32.xlu0 %v221, 64
    %v225 = vpop.permute.xlu0 %224
    %v227 = vsub.f32 %v222, %v225
    %229 = vrot.lane.b32.xlu0 %v227, 32
    %v230 = vpop.permute.xlu0 %229
    %v232 = vmul.f32 %v210, %v230
    %234 = vrot.lane.b32.xlu0 %v232, 32
    %v235 = vpop.permute.xlu0 %234
    %v237 = vadd.f32 %v221, %v235
    %239 = vrot.lane.b32.xlu0 %v237, 64
    %v240 = vpop.permute.xlu0 %239
    %242 = vst.msk [vmem:[#allocation10] sm:$0xff] %vm95, %v240
    // Predicated region
    $region38: #{tpu_custom_call.1} parent=1 // pred_check
      _
    $region39: #{tpu_custom_call.1} parent=1 // pred_check_branch
      %244 = sbr.rel (0) target = $region41
    $region40: #{tpu_custom_call.1} parent=1 // pred_region
      %s246 = ssub.s32 128, 128
      %247 = vsyncadd [#allocation4], %s246
      %s249 = sshll.u32 [#allocation10], 4
      %s250 = int_to_ptr.vmem [resolvable:$true] %s249
      %252 = dma.vmem_to_hbm [thread:$0]  %s250, 128, %s5, [#allocation4]
    $region41: #{tpu_custom_call.1} parent=1 // pred_fallthru
      _
    // Predicated region
    $region42: #{tpu_custom_call.1} parent=1 // pred_check
      _
    $region43: #{tpu_custom_call.1} parent=1 // pred_check_branch
      %254 = sbr.rel (0) target = $region45
    $region44: #{tpu_custom_call.1} parent=1 // pred_region
      %255 = dma.done [#allocation4], 128
    $region45: #{tpu_custom_call.1} parent=1 // pred_fallthru
      _
    %256 = vsyncpa [#allocation3], 1
    %257 = vsyncpa [#allocation6], 1
    %258 = vsyncpa [#allocation9], 1
    %259 = vsyncpa [#allocation4], 1

</llo_original>
